<compile_context>
chip_gen: v7x
topology: tpu7x:2x2x1
jax: 0.10.0
libtpu: 0.0.40
codegen_flags: <defaults>
</compile_context>

<pallas_src>
import jax
import jax.numpy as jnp
import numpy as np
from jax.experimental import pallas as pl
from jax.experimental.pallas import tpu as pltpu

LN_EPS = 1e-5  # nn.LayerNorm default


def mlp_block_kernel(x_ref, w_ref, b_ref, gamma_ref, beta_ref, o_ref, acc_ref):
    # x_ref:     (block_m, block_k)   native dtype (f32 or bf16)
    # w_ref:     (block_k, N)         native dtype
    # b_ref:     (1, N)               f32
    # gamma_ref: (1, N)               f32
    # beta_ref:  (1, N)               f32
    # o_ref:     (block_m, N)         x.dtype
    # acc_ref:   (block_m, N)         f32 VMEM scratch accumulator
    k = pl.program_id(1)

    @pl.when(k == 0)
    def _init():
        acc_ref[...] = jnp.zeros_like(acc_ref)

    # MXU matmul on native-dtype operands, f32 accumulation.
    acc_ref[...] += jnp.dot(x_ref[...], w_ref[...],
                            preferred_element_type=jnp.float32)

    @pl.when(k == pl.num_programs(1) - 1)
    def _finalize():
        # Bias + ReLU
        y = acc_ref[...] + b_ref[...]
        y = jnp.maximum(y, 0.0)
        # LayerNorm over out_features (last axis), f32 epilogue.
        mean = jnp.mean(y, axis=-1, keepdims=True)
        centered = y - mean
        var = jnp.mean(centered * centered, axis=-1, keepdims=True)
        y = centered * jax.lax.rsqrt(var + LN_EPS)
        y = y * gamma_ref[...] + beta_ref[...]
        # Dropout: eval mode -> identity.
        o_ref[...] = y.astype(o_ref.dtype)


def mlp_block(x, w, b, gamma, beta, *, block_m=128, block_k=256):
    """x: (B, in_features); w: (in_features, out_features); b/gamma/beta: (out,)."""
    B, K = x.shape
    Kw, N = w.shape
    assert K == Kw, "weight must be (in_features, out_features)"

    block_m = min(block_m, B)
    block_k = min(block_k, K)

    # Lane / sublane alignment checks.
    assert N % 128 == 0, "out_features must be a multiple of 128 (lane-dense output)"
    assert B % block_m == 0, "batch must be divisible by block_m"
    assert K % block_k == 0, "in_features must be divisible by block_k"
    assert block_k % 128 == 0 or block_k == K, "block_k must be lane-aligned"
    sublane = 16 if x.dtype == jnp.bfloat16 else 8
    assert block_m % sublane == 0, f"block_m must be a multiple of {sublane} for {x.dtype}"

    # Keep bias / LayerNorm params in f32 (f32 epilogue on all generations).
    b2 = b.reshape(1, N).astype(jnp.float32)
    gamma2 = gamma.reshape(1, N).astype(jnp.float32)
    beta2 = beta.reshape(1, N).astype(jnp.float32)

    grid = (B // block_m, K // block_k)
    return pl.pallas_call(
        mlp_block_kernel,
        out_shape=jax.ShapeDtypeStruct((B, N), x.dtype),
        grid_spec=pltpu.PrefetchScalarGridSpec(
            num_scalar_prefetch=0,
            grid=grid,
            in_specs=[
                pl.BlockSpec((block_m, block_k), lambda i, k: (i, k)),   # x
                pl.BlockSpec((block_k, N), lambda i, k: (k, 0)),         # w
                pl.BlockSpec((1, N), lambda i, k: (0, 0)),               # bias
                pl.BlockSpec((1, N), lambda i, k: (0, 0)),               # gamma
                pl.BlockSpec((1, N), lambda i, k: (0, 0)),               # beta
            ],
            out_specs=pl.BlockSpec((block_m, N), lambda i, k: (i, 0)),
            scratch_shapes=[pltpu.VMEM((block_m, N), jnp.float32)],
        ),
        compiler_params=pltpu.CompilerParams(
            dimension_semantics=("parallel", "arbitrary"),
        ),
    )(x, w, b2, gamma2, beta2)


def mlp_block_ref(x, w, b, gamma, beta):
    y = x @ w + b
    y = jnp.maximum(y, 0.0)
    mean = jnp.mean(y, axis=-1, keepdims=True)
    var = jnp.mean((y - mean) ** 2, axis=-1, keepdims=True)
    y = (y - mean) / jnp.sqrt(var + LN_EPS)
    return y * gamma + beta


if __name__ == "__main__":
    key = jax.random.PRNGKey(0)
    B, in_features, out_features = 256, 512, 256   # 128-aligned M/N, K-tiled

    kx, kw, kb = jax.random.split(key, 3)
    x = jax.random.normal(kx, (B, in_features), dtype=jnp.float32)

    # Deterministic parameter init (mimicking nn.Linear's uniform init range).
    bound = 1.0 / np.sqrt(in_features)
    w = jax.random.uniform(kw, (in_features, out_features),
                           minval=-bound, maxval=bound, dtype=jnp.float32)
    b = jax.random.uniform(kb, (out_features,),
                           minval=-bound, maxval=bound, dtype=jnp.float32)
    gamma = jnp.ones((out_features,), dtype=jnp.float32)   # LayerNorm weight
    beta = jnp.zeros((out_features,), dtype=jnp.float32)   # LayerNorm bias

    # f32 operands passed natively (no in-kernel pre-cast), tight check.
    out = jax.block_until_ready(mlp_block(x, w, b, gamma, beta))
    ref = mlp_block_ref(x, w, b, gamma, beta)
    np.testing.assert_allclose(np.asarray(out), np.asarray(ref),
                               atol=1e-4, rtol=1e-4)

    # bf16 MXU path (native bf16 operands, f32 accumulation + f32 epilogue).
    out_bf16 = jax.block_until_ready(
        mlp_block(x.astype(jnp.bfloat16), w.astype(jnp.bfloat16), b, gamma, beta))
    np.testing.assert_allclose(np.asarray(out_bf16, dtype=np.float32),
                               np.asarray(ref), atol=1e-1, rtol=1e-1)

    print("KERNEL_OK")
</pallas_src>

<mosaic_0001>
module attributes {stable_mosaic.version = 11 : i64} {
  func.func @mlp_block_kernel(%arg0: i32, %arg1: i32, %arg2: memref<128x256xf32, #tpu.memory_space<vmem>>, %arg3: memref<256x256xf32, #tpu.memory_space<vmem>>, %arg4: memref<1x256xf32, #tpu.memory_space<vmem>>, %arg5: memref<1x256xf32, #tpu.memory_space<vmem>>, %arg6: memref<1x256xf32, #tpu.memory_space<vmem>>, %arg7: memref<128x256xf32, #tpu.memory_space<vmem>>, %arg8: memref<128x256xf32, #tpu.memory_space<vmem>>) attributes {dimension_semantics = [#tpu.dimension_semantics<parallel>, #tpu.dimension_semantics<arbitrary>], iteration_bounds = array<i64: 2, 2>, scalar_prefetch = 0 : i64, scratch_operands = 1 : i64, tpu.core_type = #tpu.core_type<tc>, window_params = [{transform_indices = @transform_0, window_bounds = array<i64: 128, 256>}, {transform_indices = @transform_1, window_bounds = array<i64: 256, 256>}, {pipeline_mode = #tpu.pipeline_mode<synchronous>, transform_indices = @transform_2, window_bounds = array<i64: 1, 256>}, {pipeline_mode = #tpu.pipeline_mode<synchronous>, transform_indices = @transform_3, window_bounds = array<i64: 1, 256>}, {pipeline_mode = #tpu.pipeline_mode<synchronous>, transform_indices = @transform_4, window_bounds = array<i64: 1, 256>}, {transform_indices = @transform_5, window_bounds = array<i64: 128, 256>}]} {
    %c0_i32 = arith.constant 0 : i32
    %0 = arith.cmpi eq, %arg1, %c0_i32 : i32
    %1 = arith.extui %0 : i1 to i32
    %c0_i32_0 = arith.constant 0 : i32
    %2 = arith.cmpi ne, %1, %c0_i32_0 : i32
    scf.if %2 {
      %cst_9 = arith.constant 0.000000e+00 : f32
      %12 = vector.broadcast %cst_9 : f32 to vector<128x256xf32>
      %c0_10 = arith.constant 0 : index
      %c0_11 = arith.constant 0 : index
      %13 = vector.load %arg8[%c0_10, %c0_11] : memref<128x256xf32, #tpu.memory_space<vmem>>, vector<128x256xf32>
      tpu.vector_store %arg8[%c0_10, %c0_11], %12 {strides = array<i32>} : memref<128x256xf32, #tpu.memory_space<vmem>>, vector<128x256xf32>,
    } else {
    }
    %c0 = arith.constant 0 : index
    %c0_1 = arith.constant 0 : index
    %3 = vector.load %arg8[%c0, %c0_1] : memref<128x256xf32, #tpu.memory_space<vmem>>, vector<128x256xf32>
    %c0_2 = arith.constant 0 : index
    %c0_3 = arith.constant 0 : index
    %4 = vector.load %arg2[%c0_2, %c0_3] : memref<128x256xf32, #tpu.memory_space<vmem>>, vector<128x256xf32>
    %c0_4 = arith.constant 0 : index
    %c0_5 = arith.constant 0 : index
    %5 = vector.load %arg3[%c0_4, %c0_5] : memref<256x256xf32, #tpu.memory_space<vmem>>, vector<256x256xf32>
    %cst = arith.constant dense<0.000000e+00> : vector<128x256xf32>
    %6 = tpu.matmul %4, %5, %cst {dimension_numbers = #tpu.dot_dimension_numbers<[1], [0], [0], [1], [0, 0, 1, 1], [], []>} : vector<128x256xf32>, vector<256x256xf32>, vector<128x256xf32> -> vector<128x256xf32>
    %7 = arith.addf %3, %6 : vector<128x256xf32>
    %c0_6 = arith.constant 0 : index
    %c0_7 = arith.constant 0 : index
    %8 = vector.load %arg8[%c0_6, %c0_7] : memref<128x256xf32, #tpu.memory_space<vmem>>, vector<128x256xf32>
    tpu.vector_store %arg8[%c0_6, %c0_7], %7 {strides = array<i32>} : memref<128x256xf32, #tpu.memory_space<vmem>>, vector<128x256xf32>,
    %c1_i32 = arith.constant 1 : i32
    %9 = arith.cmpi eq, %arg1, %c1_i32 : i32
    %10 = arith.extui %9 : i1 to i32
    %c0_i32_8 = arith.constant 0 : i32
    %11 = arith.cmpi ne, %10, %c0_i32_8 : i32
    scf.if %11 {
      %c0_9 = arith.constant 0 : index
      %c0_10 = arith.constant 0 : index
      %12 = vector.load %arg8[%c0_9, %c0_10] : memref<128x256xf32, #tpu.memory_space<vmem>>, vector<128x256xf32>
      %c0_11 = arith.constant 0 : index
      %c0_12 = arith.constant 0 : index
      %13 = vector.load %arg4[%c0_11, %c0_12] : memref<1x256xf32, #tpu.memory_space<vmem>>, vector<1x256xf32>
      %14 = vector.broadcast %13 : vector<1x256xf32> to vector<128x256xf32>
      %15 = arith.addf %12, %14 : vector<128x256xf32>
      %cst_13 = arith.constant 0.000000e+00 : f32
      %16 = vector.broadcast %cst_13 : f32 to vector<128x256xf32>
      %17 = arith.maximumf %15, %16 : vector<128x256xf32>
      %cst_14 = arith.constant dense<0.000000e+00> : vector<128xf32>
      %18 = vector.multi_reduction <add>, %17, %cst_14 [1] : vector<128x256xf32> to vector<128xf32>
      %19 = vector.shape_cast %18 : vector<128xf32> to vector<128x1xf32>
      %cst_15 = arith.constant 2.560000e+02 : f32
      %20 = vector.broadcast %cst_15 : f32 to vector<128x1xf32>
      %21 = arith.divf %19, %20 : vector<128x1xf32>
      %22 = vector.broadcast %21 : vector<128x1xf32> to vector<128x256xf32>
      %23 = arith.subf %17, %22 : vector<128x256xf32>
      %24 = arith.mulf %23, %23 : vector<128x256xf32>
      %cst_16 = arith.constant dense<0.000000e+00> : vector<128xf32>
      %25 = vector.multi_reduction <add>, %24, %cst_16 [1] : vector<128x256xf32> to vector<128xf32>
      %26 = vector.shape_cast %25 : vector<128xf32> to vector<128x1xf32>
      %cst_17 = arith.constant 2.560000e+02 : f32
      %27 = vector.broadcast %cst_17 : f32 to vector<128x1xf32>
      %28 = arith.divf %26, %27 : vector<128x1xf32>
      %cst_18 = arith.constant 9.99999974E-6 : f32
      %29 = vector.broadcast %cst_18 : f32 to vector<128x1xf32>
      %30 = arith.addf %28, %29 : vector<128x1xf32>
      %31 = math.rsqrt %30 : vector<128x1xf32>
      %32 = vector.broadcast %31 : vector<128x1xf32> to vector<128x256xf32>
      %33 = arith.mulf %23, %32 : vector<128x256xf32>
      %c0_19 = arith.constant 0 : index
      %c0_20 = arith.constant 0 : index
      %34 = vector.load %arg5[%c0_19, %c0_20] : memref<1x256xf32, #tpu.memory_space<vmem>>, vector<1x256xf32>
      %35 = vector.broadcast %34 : vector<1x256xf32> to vector<128x256xf32>
      %36 = arith.mulf %33, %35 : vector<128x256xf32>
      %c0_21 = arith.constant 0 : index
      %c0_22 = arith.constant 0 : index
      %37 = vector.load %arg6[%c0_21, %c0_22] : memref<1x256xf32, #tpu.memory_space<vmem>>, vector<1x256xf32>
      %38 = vector.broadcast %37 : vector<1x256xf32> to vector<128x256xf32>
      %39 = arith.addf %36, %38 : vector<128x256xf32>
      %c0_23 = arith.constant 0 : index
      %c0_24 = arith.constant 0 : index
      %40 = vector.load %arg7[%c0_23, %c0_24] : memref<128x256xf32, #tpu.memory_space<vmem>>, vector<128x256xf32>
      tpu.vector_store %arg7[%c0_23, %c0_24], %39 {strides = array<i32>} : memref<128x256xf32, #tpu.memory_space<vmem>>, vector<128x256xf32>,
    } else {
    }
    return
  }
  func.func @transform_0(%arg0: i32, %arg1: i32) -> (i32, i32) {
    %c0_i32 = arith.constant 0 : i32
    return %arg0, %arg1 : i32, i32
  }
  func.func @transform_1(%arg0: i32, %arg1: i32) -> (i32, i32) {
    %c0_i32 = arith.constant 0 : i32
    %c0_i32_0 = arith.constant 0 : i32
    return %arg1, %c0_i32 : i32, i32
  }
  func.func @transform_2(%arg0: i32, %arg1: i32) -> (i32, i32) {
    %c0_i32 = arith.constant 0 : i32
    %c0_i32_0 = arith.constant 0 : i32
    %c0_i32_1 = arith.constant 0 : i32
    return %c0_i32, %c0_i32_0 : i32, i32
  }
  func.func @transform_3(%arg0: i32, %arg1: i32) -> (i32, i32) {
    %c0_i32 = arith.constant 0 : i32
    %c0_i32_0 = arith.constant 0 : i32
    %c0_i32_1 = arith.constant 0 : i32
    return %c0_i32, %c0_i32_0 : i32, i32
  }
  func.func @transform_4(%arg0: i32, %arg1: i32) -> (i32, i32) {
    %c0_i32 = arith.constant 0 : i32
    %c0_i32_0 = arith.constant 0 : i32
    %c0_i32_1 = arith.constant 0 : i32
    return %c0_i32, %c0_i32_0 : i32, i32
  }
  func.func @transform_5(%arg0: i32, %arg1: i32) -> (i32, i32) {
    %c0_i32 = arith.constant 0 : i32
    %c0_i32_0 = arith.constant 0 : i32
    return %arg0, %c0_i32 : i32, i32
  }
}

</mosaic_0001>

<llo_original>
// kernel: tpu_custom_call.1
$region0: #{tpu_custom_call.1}
  #allocation0 [shape = 'u32[]', space=smem, size = 0x4, offset = 0x4, fixed_abs, tag = 'smem constant byte address 0x4 - core index']
  #allocation1 [shape = 'u32[144,128]{1,0:T(1,128)}', space=vmem, size = 0x12000, scoped, tag = 'internal scratch']
  #allocation2 [shape = 'f32[128,256]{1,0:T(8,128)}', space=vmem, size = 0x20000, scoped, tag = 'scratch operand']
  %s0 = inlined_call_operand.hbm [shape: f32[256,512], index: 0, kind: input, shape index: {}]
  %s1 = inlined_call_operand.hbm [shape: f32[512,256], index: 1, kind: input, shape index: {}]
  %s2 = inlined_call_operand.vmem [shape: f32[1,256], index: 2, kind: input, shape index: {}]
  %s3 = inlined_call_operand.vmem [shape: f32[1,256], index: 3, kind: input, shape index: {}]
  %s4 = inlined_call_operand.vmem [shape: f32[1,256], index: 4, kind: input, shape index: {}]
  %s5 = inlined_call_operand.hbm [shape: f32[256,256], index: 5, kind: output, shape index: {}]
  %s6 = sld [smem:[#allocation0]]
  $region69: #{tpu_custom_call.1} parent=0
    _
  %s8 = ssub.s32 1, %s6
  %s9 = scalar_select 0, %s8, %s6
  $region1: #{tpu_custom_call.1} parent=0
    #allocation3 [shape = 'u8[262144]{0}', space=vmem, size = 0x40000, scoped, tag = 'input window, operand 0']
    #allocation4 [shape = 's32[2]{0}', space=sflag, size = 0x8, scoped, tag = 'scoped memory for tpu_custom_call.1']
    #allocation5 [shape = 's32[2]{0}', space=sflag, size = 0x8, scoped, tag = 'scoped memory for tpu_custom_call.1']
    #allocation6 [shape = 'u8[524288]{0}', space=vmem, size = 0x80000, scoped, tag = 'input window, operand 1']
    #allocation7 [shape = 's32[2]{0}', space=sflag, size = 0x8, scoped, tag = 'scoped memory for tpu_custom_call.1']
    #allocation8 [shape = 'u8[262144]{0}', space=vmem, size = 0x40000, scoped, tag = 'output window, operand 0']
    %10 = vsyncpa [#allocation4], 0
    %s11 = scalar_lea.sflag [#allocation4], 1
    %12 = vsyncpa %s11, 0
    %13 = vsyncpa [#allocation7], 0
    %s14 = scalar_lea.sflag [#allocation7], 1
    %15 = vsyncpa %s14, 0
    %16 = vsyncpa [#allocation5], 0
    %s17 = scalar_lea.sflag [#allocation5], 1
    %18 = vsyncpa %s17, 0
    loop: start=0, step=1, limit=6
    $region2: #{tpu_custom_call.1} parent=1 // loop_pre_header
      _
    $region3: #{tpu_custom_call.1} parent=1 // loop_header
      %s20 = sphi 0, %s24
      %p21 = scmp.ge.s32.totalorder %s20, 6
      %s27 = sphi 0, %s39
      %s28 = sphi 0, %s35
      %s29 = sphi 0, %s27
      %s30 = sphi 0, %s28
      %s31 = sphi 0, %s29
      %s32 = sphi 0, %s30
      %s44 = sphi 0, %s46
      %s47 = sphi 0, %s44
      %s48 = sphi 0, %s47
      %s64 = sphi 0, %s48
      %s70 = sphi 0, %s72
      %s73 = sphi 0, %s70
      %s74 = sphi 0, %s73
      %s90 = sphi 0, %s74
      %s94 = sphi 0, %s94
      %s96 = sphi 0, %s94
      %s97 = sphi 0, %s96
      %s111 = sphi 0, %s97
      %s115 = sphi 0, %s115
      %s117 = sphi 0, %s115
      %s118 = sphi 0, %s117
      %s132 = sphi 0, %s118
      %s136 = sphi 0, %s136
      %s138 = sphi 0, %s136
      %s139 = sphi 0, %s138
      %s153 = sphi 0, %s139
      %s159 = sphi 0, %s161
      %s162 = sphi 0, %s159
      %s163 = sphi 0, %s162
      %s179 = sphi 0, %s163
    $region4: #{tpu_custom_call.1} parent=1 // loop_header_branch
      %23 = sbr.rel (%p21) target = $region8
    $region5: #{tpu_custom_call.1} parent=1 // loop_body
      %s25 = ssub.s32 %s20, 1
      %s26 = ssub.s32 %s20, 2
      %s33 = sadd.s32 1, %s28
      %p34 = scmp.ge.s32.totalorder %s33, 2
      %s35 = scalar_select %p34, 0, %s33
      %s36 = sadd.s32 1, %s27
      %s37 = scalar_select %p34, %s36, %s27
      %p38 = scmp.ge.s32.totalorder %s37, 2
      %s39 = scalar_select %p38, 0, %s37
      %s40 = ssub.s32 %s27, %s39
      %s41 = ssub.s32 %s28, %s35
      %s42 = sor.u32 %s40, %s41
      %p43 = scmp.eq.s32.totalorder %s42, 0
      %s45 = sadd.s32 %s44, 1
      %s46 = scalar_select %p43, %s44, %s45
      %p49 = pneg %p43
      %p50 = scmp.eq.s32.totalorder %s20, 3
      %p51 = por %p49, %p50
      %p52 = scmp.ne.s32.totalorder %s44, %s47
      %p53 = scmp.eq.s32.totalorder %s20, 0
      %p54 = por %p52, %p53
      %p55 = scmp.ne.s32.totalorder %s44, %s47
      %p56 = scmp.eq.s32.totalorder %s25, 3
      %p57 = por %p55, %p56
      %p58 = scmp.ne.s32.totalorder %s47, %s48
      %p59 = scmp.eq.s32.totalorder %s25, 0
      %p60 = por %p58, %p59
      %p61 = scmp.ne.s32.totalorder %s47, %s48
      %p62 = scmp.eq.s32.totalorder %s26, 3
      %p63 = por %p61, %p62
      %p65 = scmp.ne.s32.totalorder %s48, %s64
      %p66 = scmp.eq.s32.totalorder %s26, 0
      %p67 = por %p65, %p66
      %s68 = ssub.s32 %s28, %s35
      %p69 = scmp.eq.s32.totalorder %s68, 0
      %s71 = sadd.s32 %s70, 1
      %s72 = scalar_select %p69, %s70, %s71
      %p75 = pneg %p69
      %p76 = scmp.eq.s32.totalorder %s20, 3
      %p77 = por %p75, %p76
      %p78 = scmp.ne.s32.totalorder %s70, %s73
      %p79 = scmp.eq.s32.totalorder %s20, 0
      %p80 = por %p78, %p79
      %p81 = scmp.ne.s32.totalorder %s70, %s73
      %p82 = scmp.eq.s32.totalorder %s25, 3
      %p83 = por %p81, %p82
      %p84 = scmp.ne.s32.totalorder %s73, %s74
      %p85 = scmp.eq.s32.totalorder %s25, 0
      %p86 = por %p84, %p85
      %p87 = scmp.ne.s32.totalorder %s73, %s74
      %p88 = scmp.eq.s32.totalorder %s26, 3
      %p89 = por %p87, %p88
      %p91 = scmp.ne.s32.totalorder %s74, %s90
      %p92 = scmp.eq.s32.totalorder %s26, 0
      %p93 = por %p91, %p92
      %s95 = sadd.s32 %s94, 1
      %p98 = scmp.eq.s32.totalorder %s20, 3
      %p99 = scmp.ne.s32.totalorder %s94, %s96
      %p100 = scmp.eq.s32.totalorder %s20, 0
      %p101 = por %p99, %p100
      %p102 = scmp.ne.s32.totalorder %s94, %s96
      %p103 = scmp.eq.s32.totalorder %s25, 3
      %p104 = por %p102, %p103
      %p105 = scmp.ne.s32.totalorder %s96, %s97
      %p106 = scmp.eq.s32.totalorder %s25, 0
      %p107 = por %p105, %p106
      %p108 = scmp.ne.s32.totalorder %s96, %s97
      %p109 = scmp.eq.s32.totalorder %s26, 3
      %p110 = por %p108, %p109
      %p112 = scmp.ne.s32.totalorder %s97, %s111
      %p113 = scmp.eq.s32.totalorder %s26, 0
      %p114 = por %p112, %p113
      %s116 = sadd.s32 %s115, 1
      %p119 = scmp.eq.s32.totalorder %s20, 3
      %p120 = scmp.ne.s32.totalorder %s115, %s117
      %p121 = scmp.eq.s32.totalorder %s20, 0
      %p122 = por %p120, %p121
      %p123 = scmp.ne.s32.totalorder %s115, %s117
      %p124 = scmp.eq.s32.totalorder %s25, 3
      %p125 = por %p123, %p124
      %p126 = scmp.ne.s32.totalorder %s117, %s118
      %p127 = scmp.eq.s32.totalorder %s25, 0
      %p128 = por %p126, %p127
      %p129 = scmp.ne.s32.totalorder %s117, %s118
      %p130 = scmp.eq.s32.totalorder %s26, 3
      %p131 = por %p129, %p130
      %p133 = scmp.ne.s32.totalorder %s118, %s132
      %p134 = scmp.eq.s32.totalorder %s26, 0
      %p135 = por %p133, %p134
      %s137 = sadd.s32 %s136, 1
      %p140 = scmp.eq.s32.totalorder %s20, 3
      %p141 = scmp.ne.s32.totalorder %s136, %s138
      %p142 = scmp.eq.s32.totalorder %s20, 0
      %p143 = por %p141, %p142
      %p144 = scmp.ne.s32.totalorder %s136, %s138
      %p145 = scmp.eq.s32.totalorder %s25, 3
      %p146 = por %p144, %p145
      %p147 = scmp.ne.s32.totalorder %s138, %s139
      %p148 = scmp.eq.s32.totalorder %s25, 0
      %p149 = por %p147, %p148
      %p150 = scmp.ne.s32.totalorder %s138, %s139
      %p151 = scmp.eq.s32.totalorder %s26, 3
      %p152 = por %p150, %p151
      %p154 = scmp.ne.s32.totalorder %s139, %s153
      %p155 = scmp.eq.s32.totalorder %s26, 0
      %p156 = por %p154, %p155
      %s157 = ssub.s32 %s27, %s39
      %p158 = scmp.eq.s32.totalorder %s157, 0
      %s160 = sadd.s32 %s159, 1
      %s161 = scalar_select %p158, %s159, %s160
      %p164 = pneg %p158
      %p165 = scmp.eq.s32.totalorder %s20, 3
      %p166 = por %p164, %p165
      %p167 = scmp.ne.s32.totalorder %s159, %s162
      %p168 = scmp.eq.s32.totalorder %s20, 0
      %p169 = por %p167, %p168
      %p170 = scmp.ne.s32.totalorder %s159, %s162
      %p171 = scmp.eq.s32.totalorder %s25, 3
      %p172 = por %p170, %p171
      %p173 = scmp.ne.s32.totalorder %s162, %s163
      %p174 = scmp.eq.s32.totalorder %s25, 0
      %p175 = por %p173, %p174
      %p176 = scmp.ne.s32.totalorder %s162, %s163
      %p177 = scmp.eq.s32.totalorder %s26, 3
      %p178 = por %p176, %p177
      %p180 = scmp.ne.s32.totalorder %s163, %s179
      %p181 = scmp.eq.s32.totalorder %s26, 0
      %p182 = por %p180, %p181
      %p183 = scmp.le.s32.totalorder 1, %s20
      %p184 = scmp.lt.s32.totalorder %s20, 5
      %p185 = pnand %p183, %p184
      %p186 = pneg %p185
      // Predicated region
      $region9: #{tpu_custom_call.1} parent=5 // pred_check
        _
      $region10: #{tpu_custom_call.1} parent=5 // pred_check_branch
        %188 = sbr.rel (%p185) target = $region12
      $region11: #{tpu_custom_call.1} parent=5 // pred_region
        %s189 = ssub.s32 %s20, 1
        // Predicated region
        $region13: #{tpu_custom_call.1} parent=11 // pred_check
          %p190 = pneg %p107
        $region14: #{tpu_custom_call.1} parent=11 // pred_check_branch
          %192 = sbr.rel (%p190) target = $region16
        $region15: #{tpu_custom_call.1} parent=11 // pred_region
          _
        $region16: #{tpu_custom_call.1} parent=11 // pred_fallthru
          _
        // Predicated region
        $region17: #{tpu_custom_call.1} parent=11 // pred_check
          %p193 = pneg %p128
        $region18: #{tpu_custom_call.1} parent=11 // pred_check_branch
          %195 = sbr.rel (%p193) target = $region20
        $region19: #{tpu_custom_call.1} parent=11 // pred_region
          _
        $region20: #{tpu_custom_call.1} parent=11 // pred_fallthru
          _
        // Predicated region
        $region21: #{tpu_custom_call.1} parent=11 // pred_check
          %p196 = pneg %p149
        $region22: #{tpu_custom_call.1} parent=11 // pred_check_branch
          %198 = sbr.rel (%p196) target = $region24
        $region23: #{tpu_custom_call.1} parent=11 // pred_region
          _
        $region24: #{tpu_custom_call.1} parent=11 // pred_fallthru
          _
      $region12: #{tpu_custom_call.1} parent=5 // pred_fallthru
        _
      %p199 = scmp.lt.s32.totalorder %s20, 4
      // Predicated region
      $region25: #{tpu_custom_call.1} parent=5 // pred_check
        %p200 = pneg %p199
      $region26: #{tpu_custom_call.1} parent=5 // pred_check_branch
        %202 = sbr.rel (%p200) target = $region28
      $region27: #{tpu_custom_call.1} parent=5 // pred_region
        // Predicated region
        $region29: #{tpu_custom_call.1} parent=27 // pred_check
          %p203 = pneg %p54
        $region30: #{tpu_custom_call.1} parent=27 // pred_check_branch
          %205 = sbr.rel (%p203) target = $region32
        $region31: #{tpu_custom_call.1} parent=27 // pred_region
          %s206 = sand.u32 %s44, 1
          %s207 = scalar_lea.sflag [#allocation4], %s206
          %s208 = sand.u32 %s44, 1
          %s209 = smul.addr %s208, 256
          %s210 = scalar_lea.vmem [#allocation3], %s209
          %s211 = smul.u32 16, %s27
          %s212 = smul.u32 2, %s28
          %s214 = ssub.s32 4096, 4096
          %215 = vsyncadd %s207, %s214
          %s216 = smul.addr %s211, 4
          %s217 = sadd.s32 %s212, %s216
          %s218 = smul.addr %s217, 128
          %s219 = scalar_lea.hbm %s0, %s218
          %s220 = sshll.u32 %s210, 4
          %s221 = int_to_ptr.vmem [resolvable:$true] %s220
          %226 = dma.hbm_to_vmem [thread:$0]  %s219, 4096, %s221, %s207, 512, 256, 16
        $region32: #{tpu_custom_call.1} parent=27 // pred_fallthru
          _
        // Predicated region
        $region33: #{tpu_custom_call.1} parent=27 // pred_check
          %p227 = pneg %p80
        $region34: #{tpu_custom_call.1} parent=27 // pred_check_branch
          %229 = sbr.rel (%p227) target = $region36
        $region35: #{tpu_custom_call.1} parent=27 // pred_region
          %s230 = sand.u32 %s70, 1
          %s231 = scalar_lea.sflag [#allocation7], %s230
          %s232 = sand.u32 %s70, 1
          %s233 = smul.addr %s232, 512
          %s234 = scalar_lea.vmem [#allocation6], %s233
          %s235 = smul.u32 32, %s28
          %s237 = ssub.s32 8192, 8192
          %238 = vsyncadd %s231, %s237
          %s239 = smul.addr %s235, 2
          %s240 = smul.addr %s239, 128
          %s241 = scalar_lea.hbm %s1, %s240
          %s242 = sshll.u32 %s234, 4
          %s243 = int_to_ptr.vmem [resolvable:$true] %s242
          %248 = dma.hbm_to_vmem [thread:$0]  %s241, 8192, %s243, %s231, 256, 256, 16
        $region36: #{tpu_custom_call.1} parent=27 // pred_fallthru
          _
      $region28: #{tpu_custom_call.1} parent=5 // pred_fallthru
        _
      %p249 = scmp.le.s32.totalorder 1, %s20
      %p250 = scmp.lt.s32.totalorder %s20, 5
      %p251 = pnand %p249, %p250
      %p252 = pneg %p251
      // Predicated region
      $region37: #{tpu_custom_call.1} parent=5 // pred_check
        _
      $region38: #{tpu_custom_call.1} parent=5 // pred_check_branch
        %254 = sbr.rel (%p251) target = $region40
      $region39: #{tpu_custom_call.1} parent=5 // pred_region
        %s255 = ssub.s32 %s20, 1
        %s256 = sand.u32 %s47, 1
        %s257 = scalar_lea.sflag [#allocation4], %s256
        %s258 = sand.u32 %s47, 1
        %s259 = smul.addr %s258, 256
        %s260 = scalar_lea.vmem [#allocation3], %s259
        // Predicated region
        $region41: #{tpu_custom_call.1} parent=39 // pred_check
          %p261 = pneg %p60
        $region42: #{tpu_custom_call.1} parent=39 // pred_check_branch
          %263 = sbr.rel (%p261) target = $region44
        $region43: #{tpu_custom_call.1} parent=39 // pred_region
          %264 = dma.done %s257, 4096
        $region44: #{tpu_custom_call.1} parent=39 // pred_fallthru
          _
        %s265 = sand.u32 %s73, 1
        %s266 = scalar_lea.sflag [#allocation7], %s265
        %s267 = sand.u32 %s73, 1
        %s268 = smul.addr %s267, 512
        %s269 = scalar_lea.vmem [#allocation6], %s268
        // Predicated region
        $region45: #{tpu_custom_call.1} parent=39 // pred_check
          %p270 = pneg %p86
        $region46: #{tpu_custom_call.1} parent=39 // pred_check_branch
          %272 = sbr.rel (%p270) target = $region48
        $region47: #{tpu_custom_call.1} parent=39 // pred_region
          %273 = dma.done %s266, 8192
        $region48: #{tpu_custom_call.1} parent=39 // pred_fallthru
          _
        %s274 = sand.u32 %s47, 1
        %s275 = scalar_lea.sflag [#allocation4], %s274
        %s276 = sand.u32 %s47, 1
        %s277 = smul.addr %s276, 256
        %s278 = scalar_lea.vmem [#allocation3], %s277
        %p279 = pneg %p60
        %p280 = pneg %p57
        %s281 = sand.u32 %s73, 1
        %s282 = scalar_lea.sflag [#allocation7], %s281
        %s283 = sand.u32 %s73, 1
        %s284 = smul.addr %s283, 512
        %s285 = scalar_lea.vmem [#allocation6], %s284
        %p286 = pneg %p86
        %p287 = pneg %p83
        %p288 = pneg %p107
        %p289 = pneg %p104
        %p290 = pneg %p128
        %p291 = pneg %p125
        %p292 = pneg %p149
        %p293 = pneg %p146
        %p294 = pneg %p175
        %p295 = pneg %p172
        %s296 = sand.u32 %s162, 1
        %s297 = scalar_lea.sflag [#allocation5], %s296
        %s298 = sand.u32 %s162, 1
        %s299 = smul.addr %s298, 256
        %s300 = scalar_lea.vmem [#allocation8], %s299
        %s301 = smul.u32 16, %s29
        %s302 = smul.u32 2, %s30
        %s303 = smul.u32 32, %s30
        %s304 = smul.u32 16, %s29
        %p305 = scmp.eq.s32.totalorder %s30, 0
        // Predicated region
        $region49: #{tpu_custom_call.1} parent=39 // pred_check
          %p306 = pneg %p305
        $region50: #{tpu_custom_call.1} parent=39 // pred_check_branch
          %308 = sbr.rel (%p306) target = $region52
        $region51: #{tpu_custom_call.1} parent=39 // pred_region
          %309 = vst [vmem:[#allocation2] sm:$0xff] 0.0
          %310 = vst [vmem:[#allocation2 + $0x8] sm:$0xff] 0.0
          %311 = vst [vmem:[#allocation2 + $0x10] sm:$0xff] 0.0
          %312 = vst [vmem:[#allocation2 + $0x18] sm:$0xff] 0.0
          %313 = vst [vmem:[#allocation2 + $0x20] sm:$0xff] 0.0
          %314 = vst [vmem:[#allocation2 + $0x28] sm:$0xff] 0.0
          %315 = vst [vmem:[#allocation2 + $0x30] sm:$0xff] 0.0
          %316 = vst [vmem:[#allocation2 + $0x38] sm:$0xff] 0.0
          %317 = vst [vmem:[#allocation2 + $0x40] sm:$0xff] 0.0
          %318 = vst [vmem:[#allocation2 + $0x48] sm:$0xff] 0.0
          %319 = vst [vmem:[#allocation2 + $0x50] sm:$0xff] 0.0
          %320 = vst [vmem:[#allocation2 + $0x58] sm:$0xff] 0.0
          %321 = vst [vmem:[#allocation2 + $0x60] sm:$0xff] 0.0
          %322 = vst [vmem:[#allocation2 + $0x68] sm:$0xff] 0.0
          %323 = vst [vmem:[#allocation2 + $0x70] sm:$0xff] 0.0
          %324 = vst [vmem:[#allocation2 + $0x78] sm:$0xff] 0.0
          %325 = vst [vmem:[#allocation2 + $0x80] sm:$0xff] 0.0
          %326 = vst [vmem:[#allocation2 + $0x88] sm:$0xff] 0.0
          %327 = vst [vmem:[#allocation2 + $0x90] sm:$0xff] 0.0
          %328 = vst [vmem:[#allocation2 + $0x98] sm:$0xff] 0.0
          %329 = vst [vmem:[#allocation2 + $0xa0] sm:$0xff] 0.0
          %330 = vst [vmem:[#allocation2 + $0xa8] sm:$0xff] 0.0
          %331 = vst [vmem:[#allocation2 + $0xb0] sm:$0xff] 0.0
          %332 = vst [vmem:[#allocation2 + $0xb8] sm:$0xff] 0.0
          %333 = vst [vmem:[#allocation2 + $0xc0] sm:$0xff] 0.0
          %334 = vst [vmem:[#allocation2 + $0xc8] sm:$0xff] 0.0
          %335 = vst [vmem:[#allocation2 + $0xd0] sm:$0xff] 0.0
          %336 = vst [vmem:[#allocation2 + $0xd8] sm:$0xff] 0.0
          %337 = vst [vmem:[#allocation2 + $0xe0] sm:$0xff] 0.0
          %338 = vst [vmem:[#allocation2 + $0xe8] sm:$0xff] 0.0
          %339 = vst [vmem:[#allocation2 + $0xf0] sm:$0xff] 0.0
          %340 = vst [vmem:[#allocation2 + $0xf8] sm:$0xff] 0.0
        $region52: #{tpu_custom_call.1} parent=39 // pred_fallthru
          _
        %v341 = vld [vmem:[#allocation2] sm:$0xff]
        %v342 = vld [vmem:[#allocation2 + $0x8] sm:$0xff]
        %v343 = vld [vmem:[#allocation2 + $0x10] sm:$0xff]
        %v344 = vld [vmem:[#allocation2 + $0x18] sm:$0xff]
        %v345 = vld [vmem:[#allocation2 + $0x20] sm:$0xff]
        %v346 = vld [vmem:[#allocation2 + $0x28] sm:$0xff]
        %v347 = vld [vmem:[#allocation2 + $0x30] sm:$0xff]
        %v348 = vld [vmem:[#allocation2 + $0x38] sm:$0xff]
        %v349 = vld [vmem:[#allocation2 + $0x40] sm:$0xff]
        %v350 = vld [vmem:[#allocation2 + $0x48] sm:$0xff]
        %v351 = vld [vmem:[#allocation2 + $0x50] sm:$0xff]
        %v352 = vld [vmem:[#allocation2 + $0x58] sm:$0xff]
        %v353 = vld [vmem:[#allocation2 + $0x60] sm:$0xff]
        %v354 = vld [vmem:[#allocation2 + $0x68] sm:$0xff]
        %v355 = vld [vmem:[#allocation2 + $0x70] sm:$0xff]
        %v356 = vld [vmem:[#allocation2 + $0x78] sm:$0xff]
        %v357 = vld [vmem:[#allocation2 + $0x80] sm:$0xff]
        %v358 = vld [vmem:[#allocation2 + $0x88] sm:$0xff]
        %v359 = vld [vmem:[#allocation2 + $0x90] sm:$0xff]
        %v360 = vld [vmem:[#allocation2 + $0x98] sm:$0xff]
        %v361 = vld [vmem:[#allocation2 + $0xa0] sm:$0xff]
        %v362 = vld [vmem:[#allocation2 + $0xa8] sm:$0xff]
        %v363 = vld [vmem:[#allocation2 + $0xb0] sm:$0xff]
        %v364 = vld [vmem:[#allocation2 + $0xb8] sm:$0xff]
        %v365 = vld [vmem:[#allocation2 + $0xc0] sm:$0xff]
        %v366 = vld [vmem:[#allocation2 + $0xc8] sm:$0xff]
        %v367 = vld [vmem:[#allocation2 + $0xd0] sm:$0xff]
        %v368 = vld [vmem:[#allocation2 + $0xd8] sm:$0xff]
        %v369 = vld [vmem:[#allocation2 + $0xe0] sm:$0xff]
        %v370 = vld [vmem:[#allocation2 + $0xe8] sm:$0xff]
        %v371 = vld [vmem:[#allocation2 + $0xf0] sm:$0xff]
        %v372 = vld [vmem:[#allocation2 + $0xf8] sm:$0xff]
        %v373 = vld [vmem:[%s260] sm:$0xff]
        %v374 = vld [vmem:[%s260 + $0x8] sm:$0xff]
        %v375 = vld [vmem:[%s260 + $0x10] sm:$0xff]
        %v376 = vld [vmem:[%s260 + $0x18] sm:$0xff]
        %v377 = vld [vmem:[%s260 + $0x20] sm:$0xff]
        %v378 = vld [vmem:[%s260 + $0x28] sm:$0xff]
        %v379 = vld [vmem:[%s260 + $0x30] sm:$0xff]
        %v380 = vld [vmem:[%s260 + $0x38] sm:$0xff]
        %v381 = vld [vmem:[%s260 + $0x40] sm:$0xff]
        %v382 = vld [vmem:[%s260 + $0x48] sm:$0xff]
        %v383 = vld [vmem:[%s260 + $0x50] sm:$0xff]
        %v384 = vld [vmem:[%s260 + $0x58] sm:$0xff]
        %v385 = vld [vmem:[%s260 + $0x60] sm:$0xff]
        %v386 = vld [vmem:[%s260 + $0x68] sm:$0xff]
        %v387 = vld [vmem:[%s260 + $0x70] sm:$0xff]
        %v388 = vld [vmem:[%s260 + $0x78] sm:$0xff]
        %v389 = vld [vmem:[%s260 + $0x80] sm:$0xff]
        %v390 = vld [vmem:[%s260 + $0x88] sm:$0xff]
        %v391 = vld [vmem:[%s260 + $0x90] sm:$0xff]
        %v392 = vld [vmem:[%s260 + $0x98] sm:$0xff]
        %v393 = vld [vmem:[%s260 + $0xa0] sm:$0xff]
        %v394 = vld [vmem:[%s260 + $0xa8] sm:$0xff]
        %v395 = vld [vmem:[%s260 + $0xb0] sm:$0xff]
        %v396 = vld [vmem:[%s260 + $0xb8] sm:$0xff]
        %v397 = vld [vmem:[%s260 + $0xc0] sm:$0xff]
        %v398 = vld [vmem:[%s260 + $0xc8] sm:$0xff]
        %v399 = vld [vmem:[%s260 + $0xd0] sm:$0xff]
        %v400 = vld [vmem:[%s260 + $0xd8] sm:$0xff]
        %v401 = vld [vmem:[%s260 + $0xe0] sm:$0xff]
        %v402 = vld [vmem:[%s260 + $0xe8] sm:$0xff]
        %v403 = vld [vmem:[%s260 + $0xf0] sm:$0xff]
        %v404 = vld [vmem:[%s260 + $0xf8] sm:$0xff]
        %v405 = vld [vmem:[%s269] sm:$0xff]
        %v406 = vld [vmem:[%s269 + $0x8] sm:$0xff]
        %v407 = vld [vmem:[%s269 + $0x10] sm:$0xff]
        %v408 = vld [vmem:[%s269 + $0x18] sm:$0xff]
        %v409 = vld [vmem:[%s269 + $0x20] sm:$0xff]
        %v410 = vld [vmem:[%s269 + $0x28] sm:$0xff]
        %v411 = vld [vmem:[%s269 + $0x30] sm:$0xff]
        %v412 = vld [vmem:[%s269 + $0x38] sm:$0xff]
        %v413 = vld [vmem:[%s269 + $0x40] sm:$0xff]
        %v414 = vld [vmem:[%s269 + $0x48] sm:$0xff]
        %v415 = vld [vmem:[%s269 + $0x50] sm:$0xff]
        %v416 = vld [vmem:[%s269 + $0x58] sm:$0xff]
        %v417 = vld [vmem:[%s269 + $0x60] sm:$0xff]
        %v418 = vld [vmem:[%s269 + $0x68] sm:$0xff]
        %v419 = vld [vmem:[%s269 + $0x70] sm:$0xff]
        %v420 = vld [vmem:[%s269 + $0x78] sm:$0xff]
        %v421 = vld [vmem:[%s269 + $0x80] sm:$0xff]
        %v422 = vld [vmem:[%s269 + $0x88] sm:$0xff]
        %v423 = vld [vmem:[%s269 + $0x90] sm:$0xff]
        %v424 = vld [vmem:[%s269 + $0x98] sm:$0xff]
        %v425 = vld [vmem:[%s269 + $0xa0] sm:$0xff]
        %v426 = vld [vmem:[%s269 + $0xa8] sm:$0xff]
        %v427 = vld [vmem:[%s269 + $0xb0] sm:$0xff]
        %v428 = vld [vmem:[%s269 + $0xb8] sm:$0xff]
        %v429 = vld [vmem:[%s269 + $0xc0] sm:$0xff]
        %v430 = vld [vmem:[%s269 + $0xc8] sm:$0xff]
        %v431 = vld [vmem:[%s269 + $0xd0] sm:$0xff]
        %v432 = vld [vmem:[%s269 + $0xd8] sm:$0xff]
        %v433 = vld [vmem:[%s269 + $0xe0] sm:$0xff]
        %v434 = vld [vmem:[%s269 + $0xe8] sm:$0xff]
        %v435 = vld [vmem:[%s269 + $0xf0] sm:$0xff]
        %v436 = vld [vmem:[%s269 + $0xf8] sm:$0xff]
        %v437 = vld [vmem:[%s269 + $0x100] sm:$0xff]
        %v438 = vld [vmem:[%s269 + $0x108] sm:$0xff]
        %v439 = vld [vmem:[%s269 + $0x110] sm:$0xff]
        %v440 = vld [vmem:[%s269 + $0x118] sm:$0xff]
        %v441 = vld [vmem:[%s269 + $0x120] sm:$0xff]
        %v442 = vld [vmem:[%s269 + $0x128] sm:$0xff]
        %v443 = vld [vmem:[%s269 + $0x130] sm:$0xff]
        %v444 = vld [vmem:[%s269 + $0x138] sm:$0xff]
        %v445 = vld [vmem:[%s269 + $0x140] sm:$0xff]
        %v446 = vld [vmem:[%s269 + $0x148] sm:$0xff]
        %v447 = vld [vmem:[%s269 + $0x150] sm:$0xff]
        %v448 = vld [vmem:[%s269 + $0x158] sm:$0xff]
        %v449 = vld [vmem:[%s269 + $0x160] sm:$0xff]
        %v450 = vld [vmem:[%s269 + $0x168] sm:$0xff]
        %v451 = vld [vmem:[%s269 + $0x170] sm:$0xff]
        %v452 = vld [vmem:[%s269 + $0x178] sm:$0xff]
        %v453 = vld [vmem:[%s269 + $0x180] sm:$0xff]
        %v454 = vld [vmem:[%s269 + $0x188] sm:$0xff]
        %v455 = vld [vmem:[%s269 + $0x190] sm:$0xff]
        %v456 = vld [vmem:[%s269 + $0x198] sm:$0xff]
        %v457 = vld [vmem:[%s269 + $0x1a0] sm:$0xff]
        %v458 = vld [vmem:[%s269 + $0x1a8] sm:$0xff]
        %v459 = vld [vmem:[%s269 + $0x1b0] sm:$0xff]
        %v460 = vld [vmem:[%s269 + $0x1b8] sm:$0xff]
        %v461 = vld [vmem:[%s269 + $0x1c0] sm:$0xff]
        %v462 = vld [vmem:[%s269 + $0x1c8] sm:$0xff]
        %v463 = vld [vmem:[%s269 + $0x1d0] sm:$0xff]
        %v464 = vld [vmem:[%s269 + $0x1d8] sm:$0xff]
        %v465 = vld [vmem:[%s269 + $0x1e0] sm:$0xff]
        %v466 = vld [vmem:[%s269 + $0x1e8] sm:$0xff]
        %v467 = vld [vmem:[%s269 + $0x1f0] sm:$0xff]
        %v468 = vld [vmem:[%s269 + $0x1f8] sm:$0xff]
        %469 = vmatprep.subr.mxu0 %v406
        %470 = vmatpush1.msra.mxu0 %v405
        %471 = vmatprep.subr.mxu0 %v408
        %472 = vmatpush1.msra.mxu0 %v407
        %473 = vmatprep.subr.mxu0 %v410
        %474 = vmatpush1.msra.mxu0 %v409
        %475 = vmatprep.subr.mxu0 %v412
        %476 = vmatpush1.msra.mxu0 %v411
        %477 = vmatprep.subr.mxu0 %v414
        %478 = vmatpush1.msra.mxu0 %v413
        %479 = vmatprep.subr.mxu0 %v416
        %480 = vmatpush1.msra.mxu0 %v415
        %481 = vmatprep.subr.mxu0 %v418
        %482 = vmatpush1.msra.mxu0 %v417
        %483 = vmatprep.subr.mxu0 %v420
        %484 = vmatpush1.msra.mxu0 %v419
        %485 = vmatprep.subr.mxu0 %v422
        %486 = vmatpush1.msra.mxu0 %v421
        %487 = vmatprep.subr.mxu0 %v424
        %488 = vmatpush1.msra.mxu0 %v423
        %489 = vmatprep.subr.mxu0 %v426
        %490 = vmatpush1.msra.mxu0 %v425
        %491 = vmatprep.subr.mxu0 %v428
        %492 = vmatpush1.msra.mxu0 %v427
        %493 = vmatprep.subr.mxu0 %v430
        %494 = vmatpush1.msra.mxu0 %v429
        %495 = vmatprep.subr.mxu0 %v432
        %496 = vmatpush1.msra.mxu0 %v431
        %497 = vmatprep.subr.mxu0 %v434
        %498 = vmatpush1.msra.mxu0 %v433
        %499 = vmatprep.subr.mxu0 %v436
        %500 = vmatpush1.msra.mxu0 %v435
        %501 = vmatprep.subr.mxu0 %v438
        %502 = vmatpush1.msra.mxu0 %v437
        %503 = vmatprep.subr.mxu0 %v440
        %504 = vmatpush1.msra.mxu0 %v439
        %505 = vmatprep.subr.mxu0 %v442
        %506 = vmatpush1.msra.mxu0 %v441
        %507 = vmatprep.subr.mxu0 %v444
        %508 = vmatpush1.msra.mxu0 %v443
        %509 = vmatprep.subr.mxu0 %v446
        %510 = vmatpush1.msra.mxu0 %v445
        %511 = vmatprep.subr.mxu0 %v448
        %512 = vmatpush1.msra.mxu0 %v447
        %513 = vmatprep.subr.mxu0 %v450
        %514 = vmatpush1.msra.mxu0 %v449
        %515 = vmatprep.subr.mxu0 %v452
        %516 = vmatpush1.msra.mxu0 %v451
        %517 = vmatprep.subr.mxu0 %v454
        %518 = vmatpush1.msra.mxu0 %v453
        %519 = vmatprep.subr.mxu0 %v456
        %520 = vmatpush1.msra.mxu0 %v455
        %521 = vmatprep.subr.mxu0 %v458
        %522 = vmatpush1.msra.mxu0 %v457
        %523 = vmatprep.subr.mxu0 %v460
        %524 = vmatpush1.msra.mxu0 %v459
        %525 = vmatprep.subr.mxu0 %v462
        %526 = vmatpush1.msra.mxu0 %v461
        %527 = vmatprep.subr.mxu0 %v464
        %528 = vmatpush1.msra.mxu0 %v463
        %529 = vmatprep.subr.mxu0 %v466
        %530 = vmatpush1.msra.mxu0 %v465
        %531 = vmatprep.subr.mxu0 %v468
        %532 = vmatpush1.msra.mxu0 %v467
        %533 = vmatprep.mubr.f32.mxu0 %v374
        %534 = vmatmul.mubr.f32.gmra.mrb[0].mxu0 %v373
        %v535 = vpop.f32.mrb[0].mxu0
        %v536 = vadd.f32 0.0, %v535
        %v537 = vpop.f32.mrb[0].mxu0
        %v538 = vadd.f32 0.0, %v537
        %539 = vmatprep.mubr.f32.mxu0 %v376
        %540 = vmatmul.mubr.f32.gmra.mrb[0].mxu0 %v375
        %v541 = vpop.f32.mrb[0].mxu0
        %v542 = vadd.f32 0.0, %v541
        %v543 = vpop.f32.mrb[0].mxu0
        %v544 = vadd.f32 0.0, %v543
        %545 = vmatprep.mubr.f32.mxu0 %v378
        %546 = vmatmul.mubr.f32.gmra.mrb[0].mxu0 %v377
        %v547 = vpop.f32.mrb[0].mxu0
        %v548 = vadd.f32 0.0, %v547
        %v549 = vpop.f32.mrb[0].mxu0
        %v550 = vadd.f32 0.0, %v549
        %551 = vmatprep.mubr.f32.mxu0 %v380
        %552 = vmatmul.mubr.f32.gmra.mrb[0].mxu0 %v379
        %v553 = vpop.f32.mrb[0].mxu0
        %v554 = vadd.f32 0.0, %v553
        %v555 = vpop.f32.mrb[0].mxu0
        %v556 = vadd.f32 0.0, %v555
        %557 = vmatprep.mubr.f32.mxu0 %v382
        %558 = vmatmul.mubr.f32.gmra.mrb[0].mxu0 %v381
        %v559 = vpop.f32.mrb[0].mxu0
        %v560 = vadd.f32 0.0, %v559
        %v561 = vpop.f32.mrb[0].mxu0
        %v562 = vadd.f32 0.0, %v561
        %563 = vmatprep.mubr.f32.mxu0 %v384
        %564 = vmatmul.mubr.f32.gmra.mrb[0].mxu0 %v383
        %v565 = vpop.f32.mrb[0].mxu0
        %v566 = vadd.f32 0.0, %v565
        %v567 = vpop.f32.mrb[0].mxu0
        %v568 = vadd.f32 0.0, %v567
        %569 = vmatprep.mubr.f32.mxu0 %v386
        %570 = vmatmul.mubr.f32.gmra.mrb[0].mxu0 %v385
        %v571 = vpop.f32.mrb[0].mxu0
        %v572 = vadd.f32 0.0, %v571
        %v573 = vpop.f32.mrb[0].mxu0
        %v574 = vadd.f32 0.0, %v573
        %575 = vmatprep.mubr.f32.mxu0 %v388
        %576 = vmatmul.mubr.f32.gmra.mrb[0].mxu0 %v387
        %v577 = vpop.f32.mrb[0].mxu0
        %v578 = vadd.f32 0.0, %v577
        %v579 = vpop.f32.mrb[0].mxu0
        %v580 = vadd.f32 0.0, %v579
        %581 = vmatprep.mubr.f32.mxu0 %v390
        %582 = vmatmul.mubr.f32.gmra.mrb[0].mxu0 %v389
        %v583 = vpop.f32.mrb[0].mxu0
        %v584 = vadd.f32 0.0, %v583
        %v585 = vpop.f32.mrb[0].mxu0
        %v586 = vadd.f32 0.0, %v585
        %587 = vmatprep.mubr.f32.mxu0 %v392
        %588 = vmatmul.mubr.f32.gmra.mrb[0].mxu0 %v391
        %v589 = vpop.f32.mrb[0].mxu0
        %v590 = vadd.f32 0.0, %v589
        %v591 = vpop.f32.mrb[0].mxu0
        %v592 = vadd.f32 0.0, %v591
        %593 = vmatprep.mubr.f32.mxu0 %v394
        %594 = vmatmul.mubr.f32.gmra.mrb[0].mxu0 %v393
        %v595 = vpop.f32.mrb[0].mxu0
        %v596 = vadd.f32 0.0, %v595
        %v597 = vpop.f32.mrb[0].mxu0
        %v598 = vadd.f32 0.0, %v597
        %599 = vmatprep.mubr.f32.mxu0 %v396
        %600 = vmatmul.mubr.f32.gmra.mrb[0].mxu0 %v395
        %v601 = vpop.f32.mrb[0].mxu0
        %v602 = vadd.f32 0.0, %v601
        %v603 = vpop.f32.mrb[0].mxu0
        %v604 = vadd.f32 0.0, %v603
        %605 = vmatprep.mubr.f32.mxu0 %v398
        %606 = vmatmul.mubr.f32.gmra.mrb[0].mxu0 %v397
        %v607 = vpop.f32.mrb[0].mxu0
        %v608 = vadd.f32 0.0, %v607
        %v609 = vpop.f32.mrb[0].mxu0
        %v610 = vadd.f32 0.0, %v609
        %611 = vmatprep.mubr.f32.mxu0 %v400
        %612 = vmatmul.mubr.f32.gmra.mrb[0].mxu0 %v399
        %v613 = vpop.f32.mrb[0].mxu0
        %v614 = vadd.f32 0.0, %v613
        %v615 = vpop.f32.mrb[0].mxu0
        %v616 = vadd.f32 0.0, %v615
        %617 = vmatprep.mubr.f32.mxu0 %v402
        %618 = vmatmul.mubr.f32.gmra.mrb[0].mxu0 %v401
        %v619 = vpop.f32.mrb[0].mxu0
        %v620 = vadd.f32 0.0, %v619
        %v621 = vpop.f32.mrb[0].mxu0
        %v622 = vadd.f32 0.0, %v621
        %623 = vmatprep.mubr.f32.mxu0 %v404
        %624 = vmatmul.mubr.f32.gmra.mrb[0].mxu0 %v403
        %v625 = vpop.f32.mrb[0].mxu0
        %v626 = vadd.f32 0.0, %v625
        %v627 = vpop.f32.mrb[0].mxu0
        %v628 = vadd.f32 0.0, %v627
        %629 = vdwg.mxu0
        %v630 = vadd.f32 %v341, %v536
        %v631 = vadd.f32 %v342, %v538
        %v632 = vadd.f32 %v343, %v542
        %v633 = vadd.f32 %v344, %v544
        %v634 = vadd.f32 %v345, %v548
        %v635 = vadd.f32 %v346, %v550
        %v636 = vadd.f32 %v347, %v554
        %v637 = vadd.f32 %v348, %v556
        %v638 = vadd.f32 %v349, %v560
        %v639 = vadd.f32 %v350, %v562
        %v640 = vadd.f32 %v351, %v566
        %v641 = vadd.f32 %v352, %v568
        %v642 = vadd.f32 %v353, %v572
        %v643 = vadd.f32 %v354, %v574
        %v644 = vadd.f32 %v355, %v578
        %v645 = vadd.f32 %v356, %v580
        %v646 = vadd.f32 %v357, %v584
        %v647 = vadd.f32 %v358, %v586
        %v648 = vadd.f32 %v359, %v590
        %v649 = vadd.f32 %v360, %v592
        %v650 = vadd.f32 %v361, %v596
        %v651 = vadd.f32 %v362, %v598
        %v652 = vadd.f32 %v363, %v602
        %v653 = vadd.f32 %v364, %v604
        %v654 = vadd.f32 %v365, %v608
        %v655 = vadd.f32 %v366, %v610
        %v656 = vadd.f32 %v367, %v614
        %v657 = vadd.f32 %v368, %v616
        %v658 = vadd.f32 %v369, %v620
        %v659 = vadd.f32 %v370, %v622
        %v660 = vadd.f32 %v371, %v626
        %v661 = vadd.f32 %v372, %v628
        %662 = vst [vmem:[#allocation2] sm:$0xff] %v630
        %663 = vst [vmem:[#allocation2 + $0x8] sm:$0xff] %v631
        %664 = vst [vmem:[#allocation2 + $0x10] sm:$0xff] %v632
        %665 = vst [vmem:[#allocation2 + $0x18] sm:$0xff] %v633
        %666 = vst [vmem:[#allocation2 + $0x20] sm:$0xff] %v634
        %667 = vst [vmem:[#allocation2 + $0x28] sm:$0xff] %v635
        %668 = vst [vmem:[#allocation2 + $0x30] sm:$0xff] %v636
        %669 = vst [vmem:[#allocation2 + $0x38] sm:$0xff] %v637
        %670 = vst [vmem:[#allocation2 + $0x40] sm:$0xff] %v638
        %671 = vst [vmem:[#allocation2 + $0x48] sm:$0xff] %v639
        %672 = vst [vmem:[#allocation2 + $0x50] sm:$0xff] %v640
        %673 = vst [vmem:[#allocation2 + $0x58] sm:$0xff] %v641
        %674 = vst [vmem:[#allocation2 + $0x60] sm:$0xff] %v642
        %675 = vst [vmem:[#allocation2 + $0x68] sm:$0xff] %v643
        %676 = vst [vmem:[#allocation2 + $0x70] sm:$0xff] %v644
        %677 = vst [vmem:[#allocation2 + $0x78] sm:$0xff] %v645
        %678 = vst [vmem:[#allocation2 + $0x80] sm:$0xff] %v646
        %679 = vst [vmem:[#allocation2 + $0x88] sm:$0xff] %v647
        %680 = vst [vmem:[#allocation2 + $0x90] sm:$0xff] %v648
        %681 = vst [vmem:[#allocation2 + $0x98] sm:$0xff] %v649
        %682 = vst [vmem:[#allocation2 + $0xa0] sm:$0xff] %v650
        %683 = vst [vmem:[#allocation2 + $0xa8] sm:$0xff] %v651
        %684 = vst [vmem:[#allocation2 + $0xb0] sm:$0xff] %v652
        %685 = vst [vmem:[#allocation2 + $0xb8] sm:$0xff] %v653
        %686 = vst [vmem:[#allocation2 + $0xc0] sm:$0xff] %v654
        %687 = vst [vmem:[#allocation2 + $0xc8] sm:$0xff] %v655
        %688 = vst [vmem:[#allocation2 + $0xd0] sm:$0xff] %v656
        %689 = vst [vmem:[#allocation2 + $0xd8] sm:$0xff] %v657
        %690 = vst [vmem:[#allocation2 + $0xe0] sm:$0xff] %v658
        %691 = vst [vmem:[#allocation2 + $0xe8] sm:$0xff] %v659
        %692 = vst [vmem:[#allocation2 + $0xf0] sm:$0xff] %v660
        %693 = vst [vmem:[#allocation2 + $0xf8] sm:$0xff] %v661
        %p694 = scmp.eq.s32.totalorder %s30, 1
        // Predicated region
        $region53: #{tpu_custom_call.1} parent=39 // pred_check
          %p695 = pneg %p694
        $region54: #{tpu_custom_call.1} parent=39 // pred_check_branch
          %697 = sbr.rel (%p695) target = $region56
        $region55: #{tpu_custom_call.1} parent=39 // pred_region
          %v698 = vld [vmem:[#allocation2] sm:$0xff]
          %v699 = vld [vmem:[#allocation2 + $0x8] sm:$0xff]
          %v700 = vld [vmem:[#allocation2 + $0x10] sm:$0xff]
          %v701 = vld [vmem:[#allocation2 + $0x18] sm:$0xff]
          %v702 = vld [vmem:[#allocation2 + $0x20] sm:$0xff]
          %v703 = vld [vmem:[#allocation2 + $0x28] sm:$0xff]
          %v704 = vld [vmem:[#allocation2 + $0x30] sm:$0xff]
          %v705 = vld [vmem:[#allocation2 + $0x38] sm:$0xff]
          %v706 = vld [vmem:[#allocation2 + $0x40] sm:$0xff]
          %v707 = vld [vmem:[#allocation2 + $0x48] sm:$0xff]
          %v708 = vld [vmem:[#allocation2 + $0x50] sm:$0xff]
          %v709 = vld [vmem:[#allocation2 + $0x58] sm:$0xff]
          %v710 = vld [vmem:[#allocation2 + $0x60] sm:$0xff]
          %v711 = vld [vmem:[#allocation2 + $0x68] sm:$0xff]
          %v712 = vld [vmem:[#allocation2 + $0x70] sm:$0xff]
          %v713 = vld [vmem:[#allocation2 + $0x78] sm:$0xff]
          %v714 = vld [vmem:[#allocation2 + $0x80] sm:$0xff]
          %v715 = vld [vmem:[#allocation2 + $0x88] sm:$0xff]
          %v716 = vld [vmem:[#allocation2 + $0x90] sm:$0xff]
          %v717 = vld [vmem:[#allocation2 + $0x98] sm:$0xff]
          %v718 = vld [vmem:[#allocation2 + $0xa0] sm:$0xff]
          %v719 = vld [vmem:[#allocation2 + $0xa8] sm:$0xff]
          %v720 = vld [vmem:[#allocation2 + $0xb0] sm:$0xff]
          %v721 = vld [vmem:[#allocation2 + $0xb8] sm:$0xff]
          %v722 = vld [vmem:[#allocation2 + $0xc0] sm:$0xff]
          %v723 = vld [vmem:[#allocation2 + $0xc8] sm:$0xff]
          %v724 = vld [vmem:[#allocation2 + $0xd0] sm:$0xff]
          %v725 = vld [vmem:[#allocation2 + $0xd8] sm:$0xff]
          %v726 = vld [vmem:[#allocation2 + $0xe0] sm:$0xff]
          %v727 = vld [vmem:[#allocation2 + $0xe8] sm:$0xff]
          %v728 = vld [vmem:[#allocation2 + $0xf0] sm:$0xff]
          %v729 = vld [vmem:[#allocation2 + $0xf8] sm:$0xff]
          %v730 = vld [vmem:[%s2] sm:$0x3]
          %v732 = vlaneseq
          %v733 = vshrl.u32 %v732, 7
          %v734 = vsub.s32 0, %v733
          %v735 = vrot.slane %v730, %v734
          %v736 = vlaneseq
          %v737 = vshrl.u32 %v736, 7
          %v738 = vsub.s32 1, %v737
          %v739 = vrot.slane %v730, %v738
          %v742 = vadd.f32 %v698, %v735
          %v743 = vadd.f32 %v699, %v739
          %v744 = vadd.f32 %v700, %v735
          %v745 = vadd.f32 %v701, %v739
          %v746 = vadd.f32 %v702, %v735
          %v747 = vadd.f32 %v703, %v739
          %v748 = vadd.f32 %v704, %v735
          %v749 = vadd.f32 %v705, %v739
          %v750 = vadd.f32 %v706, %v735
          %v751 = vadd.f32 %v707, %v739
          %v752 = vadd.f32 %v708, %v735
          %v753 = vadd.f32 %v709, %v739
          %v754 = vadd.f32 %v710, %v735
          %v755 = vadd.f32 %v711, %v739
          %v756 = vadd.f32 %v712, %v735
          %v757 = vadd.f32 %v713, %v739
          %v758 = vadd.f32 %v714, %v735
          %v759 = vadd.f32 %v715, %v739
          %v760 = vadd.f32 %v716, %v735
          %v761 = vadd.f32 %v717, %v739
          %v762 = vadd.f32 %v718, %v735
          %v763 = vadd.f32 %v719, %v739
          %v764 = vadd.f32 %v720, %v735
          %v765 = vadd.f32 %v721, %v739
          %v766 = vadd.f32 %v722, %v735
          %v767 = vadd.f32 %v723, %v739
          %v768 = vadd.f32 %v724, %v735
          %v769 = vadd.f32 %v725, %v739
          %v770 = vadd.f32 %v726, %v735
          %v771 = vadd.f32 %v727, %v739
          %v772 = vadd.f32 %v728, %v735
          %v773 = vadd.f32 %v729, %v739
          %v774 = vmax.f32 %v742, 0.0
          %v775 = vmax.f32 %v743, 0.0
          %v776 = vmax.f32 %v744, 0.0
          %v777 = vmax.f32 %v745, 0.0
          %v778 = vmax.f32 %v746, 0.0
          %v779 = vmax.f32 %v747, 0.0
          %v780 = vmax.f32 %v748, 0.0
          %v781 = vmax.f32 %v749, 0.0
          %v782 = vmax.f32 %v750, 0.0
          %v783 = vmax.f32 %v751, 0.0
          %v784 = vmax.f32 %v752, 0.0
          %v785 = vmax.f32 %v753, 0.0
          %v786 = vmax.f32 %v754, 0.0
          %v787 = vmax.f32 %v755, 0.0
          %v788 = vmax.f32 %v756, 0.0
          %v789 = vmax.f32 %v757, 0.0
          %v790 = vmax.f32 %v758, 0.0
          %v791 = vmax.f32 %v759, 0.0
          %v792 = vmax.f32 %v760, 0.0
          %v793 = vmax.f32 %v761, 0.0
          %v794 = vmax.f32 %v762, 0.0
          %v795 = vmax.f32 %v763, 0.0
          %v796 = vmax.f32 %v764, 0.0
          %v797 = vmax.f32 %v765, 0.0
          %v798 = vmax.f32 %v766, 0.0
          %v799 = vmax.f32 %v767, 0.0
          %v800 = vmax.f32 %v768, 0.0
          %v801 = vmax.f32 %v769, 0.0
          %v802 = vmax.f32 %v770, 0.0
          %v803 = vmax.f32 %v771, 0.0
          %v804 = vmax.f32 %v772, 0.0
          %v805 = vmax.f32 %v773, 0.0
          %v806 = vadd.f32 %v774, %v775
          %807 = vadd.xlane.f32.xlu0 %v806
          %v808 = vpop.xlane.xlu0 %807
          %v809 = vadd.f32 %v776, %v777
          %810 = vadd.xlane.f32.xlu0 %v809
          %v811 = vpop.xlane.xlu0 %810
          %v812 = vadd.f32 %v778, %v779
          %813 = vadd.xlane.f32.xlu0 %v812
          %v814 = vpop.xlane.xlu0 %813
          %v815 = vadd.f32 %v780, %v781
          %816 = vadd.xlane.f32.xlu0 %v815
          %v817 = vpop.xlane.xlu0 %816
          %v818 = vadd.f32 %v782, %v783
          %819 = vadd.xlane.f32.xlu0 %v818
          %v820 = vpop.xlane.xlu0 %819
          %v821 = vadd.f32 %v784, %v785
          %822 = vadd.xlane.f32.xlu0 %v821
          %v823 = vpop.xlane.xlu0 %822
          %v824 = vadd.f32 %v786, %v787
          %825 = vadd.xlane.f32.xlu0 %v824
          %v826 = vpop.xlane.xlu0 %825
          %v827 = vadd.f32 %v788, %v789
          %828 = vadd.xlane.f32.xlu0 %v827
          %v829 = vpop.xlane.xlu0 %828
          %v830 = vadd.f32 %v790, %v791
          %831 = vadd.xlane.f32.xlu0 %v830
          %v832 = vpop.xlane.xlu0 %831
          %v833 = vadd.f32 %v792, %v793
          %834 = vadd.xlane.f32.xlu0 %v833
          %v835 = vpop.xlane.xlu0 %834
          %v836 = vadd.f32 %v794, %v795
          %837 = vadd.xlane.f32.xlu0 %v836
          %v838 = vpop.xlane.xlu0 %837
          %v839 = vadd.f32 %v796, %v797
          %840 = vadd.xlane.f32.xlu0 %v839
          %v841 = vpop.xlane.xlu0 %840
          %v842 = vadd.f32 %v798, %v799
          %843 = vadd.xlane.f32.xlu0 %v842
          %v844 = vpop.xlane.xlu0 %843
          %v845 = vadd.f32 %v800, %v801
          %846 = vadd.xlane.f32.xlu0 %v845
          %v847 = vpop.xlane.xlu0 %846
          %v848 = vadd.f32 %v802, %v803
          %849 = vadd.xlane.f32.xlu0 %v848
          %v850 = vpop.xlane.xlu0 %849
          %v851 = vadd.f32 %v804, %v805
          %852 = vadd.xlane.f32.xlu0 %v851
          %v853 = vpop.xlane.xlu0 %852
          %v854 = vrcp.pop 256.0
          %v855 = vmul.f32 %v808, %v854
          %v856 = vmul.f32 %v811, %v854
          %v857 = vmul.f32 %v814, %v854
          %v858 = vmul.f32 %v817, %v854
          %v859 = vmul.f32 %v820, %v854
          %v860 = vmul.f32 %v823, %v854
          %v861 = vmul.f32 %v826, %v854
          %v862 = vmul.f32 %v829, %v854
          %v863 = vmul.f32 %v832, %v854
          %v864 = vmul.f32 %v835, %v854
          %v865 = vmul.f32 %v838, %v854
          %v866 = vmul.f32 %v841, %v854
          %v867 = vmul.f32 %v844, %v854
          %v868 = vmul.f32 %v847, %v854
          %v869 = vmul.f32 %v850, %v854
          %v870 = vmul.f32 %v853, %v854
          %v871 = vsub.f32 %v774, %v855
          %v872 = vsub.f32 %v775, %v855
          %v873 = vsub.f32 %v776, %v856
          %v874 = vsub.f32 %v777, %v856
          %v875 = vsub.f32 %v778, %v857
          %v876 = vsub.f32 %v779, %v857
          %v877 = vsub.f32 %v780, %v858
          %v878 = vsub.f32 %v781, %v858
          %v879 = vsub.f32 %v782, %v859
          %v880 = vsub.f32 %v783, %v859
          %v881 = vsub.f32 %v784, %v860
          %v882 = vsub.f32 %v785, %v860
          %v883 = vsub.f32 %v786, %v861
          %v884 = vsub.f32 %v787, %v861
          %v885 = vsub.f32 %v788, %v862
          %v886 = vsub.f32 %v789, %v862
          %v887 = vsub.f32 %v790, %v863
          %v888 = vsub.f32 %v791, %v863
          %v889 = vsub.f32 %v792, %v864
          %v890 = vsub.f32 %v793, %v864
          %v891 = vsub.f32 %v794, %v865
          %v892 = vsub.f32 %v795, %v865
          %v893 = vsub.f32 %v796, %v866
          %v894 = vsub.f32 %v797, %v866
          %v895 = vsub.f32 %v798, %v867
          %v896 = vsub.f32 %v799, %v867
          %v897 = vsub.f32 %v800, %v868
          %v898 = vsub.f32 %v801, %v868
          %v899 = vsub.f32 %v802, %v869
          %v900 = vsub.f32 %v803, %v869
          %v901 = vsub.f32 %v804, %v870
          %v902 = vsub.f32 %v805, %v870
          %v903 = vmul.f32 %v871, %v871
          %v904 = vmul.f32 %v872, %v872
          %v905 = vmul.f32 %v873, %v873
          %v906 = vmul.f32 %v874, %v874
          %v907 = vmul.f32 %v875, %v875
          %v908 = vmul.f32 %v876, %v876
          %v909 = vmul.f32 %v877, %v877
          %v910 = vmul.f32 %v878, %v878
          %v911 = vmul.f32 %v879, %v879
          %v912 = vmul.f32 %v880, %v880
          %v913 = vmul.f32 %v881, %v881
          %v914 = vmul.f32 %v882, %v882
          %v915 = vmul.f32 %v883, %v883
          %v916 = vmul.f32 %v884, %v884
          %v917 = vmul.f32 %v885, %v885
          %v918 = vmul.f32 %v886, %v886
          %v919 = vmul.f32 %v887, %v887
          %v920 = vmul.f32 %v888, %v888
          %v921 = vmul.f32 %v889, %v889
          %v922 = vmul.f32 %v890, %v890
          %v923 = vmul.f32 %v891, %v891
          %v924 = vmul.f32 %v892, %v892
          %v925 = vmul.f32 %v893, %v893
          %v926 = vmul.f32 %v894, %v894
          %v927 = vmul.f32 %v895, %v895
          %v928 = vmul.f32 %v896, %v896
          %v929 = vmul.f32 %v897, %v897
          %v930 = vmul.f32 %v898, %v898
          %v931 = vmul.f32 %v899, %v899
          %v932 = vmul.f32 %v900, %v900
          %v933 = vmul.f32 %v901, %v901
          %v934 = vmul.f32 %v902, %v902
          %v935 = vadd.f32 %v903, %v904
          %936 = vadd.xlane.f32.xlu0 %v935
          %v937 = vpop.xlane.xlu0 %936
          %v938 = vadd.f32 %v905, %v906
          %939 = vadd.xlane.f32.xlu0 %v938
          %v940 = vpop.xlane.xlu0 %939
          %v941 = vadd.f32 %v907, %v908
          %942 = vadd.xlane.f32.xlu0 %v941
          %v943 = vpop.xlane.xlu0 %942
          %v944 = vadd.f32 %v909, %v910
          %945 = vadd.xlane.f32.xlu0 %v944
          %v946 = vpop.xlane.xlu0 %945
          %v947 = vadd.f32 %v911, %v912
          %948 = vadd.xlane.f32.xlu0 %v947
          %v949 = vpop.xlane.xlu0 %948
          %v950 = vadd.f32 %v913, %v914
          %951 = vadd.xlane.f32.xlu0 %v950
          %v952 = vpop.xlane.xlu0 %951
          %v953 = vadd.f32 %v915, %v916
          %954 = vadd.xlane.f32.xlu0 %v953
          %v955 = vpop.xlane.xlu0 %954
          %v956 = vadd.f32 %v917, %v918
          %957 = vadd.xlane.f32.xlu0 %v956
          %v958 = vpop.xlane.xlu0 %957
          %v959 = vadd.f32 %v919, %v920
          %960 = vadd.xlane.f32.xlu0 %v959
          %v961 = vpop.xlane.xlu0 %960
          %v962 = vadd.f32 %v921, %v922
          %963 = vadd.xlane.f32.xlu0 %v962
          %v964 = vpop.xlane.xlu0 %963
          %v965 = vadd.f32 %v923, %v924
          %966 = vadd.xlane.f32.xlu0 %v965
          %v967 = vpop.xlane.xlu0 %966
          %v968 = vadd.f32 %v925, %v926
          %969 = vadd.xlane.f32.xlu0 %v968
          %v970 = vpop.xlane.xlu0 %969
          %v971 = vadd.f32 %v927, %v928
          %972 = vadd.xlane.f32.xlu0 %v971
          %v973 = vpop.xlane.xlu0 %972
          %v974 = vadd.f32 %v929, %v930
          %975 = vadd.xlane.f32.xlu0 %v974
          %v976 = vpop.xlane.xlu0 %975
          %v977 = vadd.f32 %v931, %v932
          %978 = vadd.xlane.f32.xlu0 %v977
          %v979 = vpop.xlane.xlu0 %978
          %v980 = vadd.f32 %v933, %v934
          %981 = vadd.xlane.f32.xlu0 %v980
          %v982 = vpop.xlane.xlu0 %981
          %v983 = vmul.f32 %v937, %v854
          %v984 = vmul.f32 %v940, %v854
          %v985 = vmul.f32 %v943, %v854
          %v986 = vmul.f32 %v946, %v854
          %v987 = vmul.f32 %v949, %v854
          %v988 = vmul.f32 %v952, %v854
          %v989 = vmul.f32 %v955, %v854
          %v990 = vmul.f32 %v958, %v854
          %v991 = vmul.f32 %v961, %v854
          %v992 = vmul.f32 %v964, %v854
          %v993 = vmul.f32 %v967, %v854
          %v994 = vmul.f32 %v970, %v854
          %v995 = vmul.f32 %v973, %v854
          %v996 = vmul.f32 %v976, %v854
          %v997 = vmul.f32 %v979, %v854
          %v998 = vmul.f32 %v982, %v854
          %v999 = vadd.f32 %v983, 1e-05
          %v1000 = vadd.f32 %v984, 1e-05
          %v1001 = vadd.f32 %v985, 1e-05
          %v1002 = vadd.f32 %v986, 1e-05
          %v1003 = vadd.f32 %v987, 1e-05
          %v1004 = vadd.f32 %v988, 1e-05
          %v1005 = vadd.f32 %v989, 1e-05
          %v1006 = vadd.f32 %v990, 1e-05
          %v1007 = vadd.f32 %v991, 1e-05
          %v1008 = vadd.f32 %v992, 1e-05
          %v1009 = vadd.f32 %v993, 1e-05
          %v1010 = vadd.f32 %v994, 1e-05
          %v1011 = vadd.f32 %v995, 1e-05
          %v1012 = vadd.f32 %v996, 1e-05
          %v1013 = vadd.f32 %v997, 1e-05
          %v1014 = vadd.f32 %v998, 1e-05
          %v1015 = vrsqrt.pop %v999
          %v1016 = vrsqrt.pop %v1000
          %v1017 = vrsqrt.pop %v1001
          %v1018 = vrsqrt.pop %v1002
          %v1019 = vrsqrt.pop %v1003
          %v1020 = vrsqrt.pop %v1004
          %v1021 = vrsqrt.pop %v1005
          %v1022 = vrsqrt.pop %v1006
          %v1023 = vrsqrt.pop %v1007
          %v1024 = vrsqrt.pop %v1008
          %v1025 = vrsqrt.pop %v1009
          %v1026 = vrsqrt.pop %v1010
          %v1027 = vrsqrt.pop %v1011
          %v1028 = vrsqrt.pop %v1012
          %v1029 = vrsqrt.pop %v1013
          %v1030 = vrsqrt.pop %v1014
          %v1031 = vmul.f32 %v871, %v1015
          %v1032 = vmul.f32 %v872, %v1015
          %v1033 = vmul.f32 %v873, %v1016
          %v1034 = vmul.f32 %v874, %v1016
          %v1035 = vmul.f32 %v875, %v1017
          %v1036 = vmul.f32 %v876, %v1017
          %v1037 = vmul.f32 %v877, %v1018
          %v1038 = vmul.f32 %v878, %v1018
          %v1039 = vmul.f32 %v879, %v1019
          %v1040 = vmul.f32 %v880, %v1019
          %v1041 = vmul.f32 %v881, %v1020
          %v1042 = vmul.f32 %v882, %v1020
          %v1043 = vmul.f32 %v883, %v1021
          %v1044 = vmul.f32 %v884, %v1021
          %v1045 = vmul.f32 %v885, %v1022
          %v1046 = vmul.f32 %v886, %v1022
          %v1047 = vmul.f32 %v887, %v1023
          %v1048 = vmul.f32 %v888, %v1023
          %v1049 = vmul.f32 %v889, %v1024
          %v1050 = vmul.f32 %v890, %v1024
          %v1051 = vmul.f32 %v891, %v1025
          %v1052 = vmul.f32 %v892, %v1025
          %v1053 = vmul.f32 %v893, %v1026
          %v1054 = vmul.f32 %v894, %v1026
          %v1055 = vmul.f32 %v895, %v1027
          %v1056 = vmul.f32 %v896, %v1027
          %v1057 = vmul.f32 %v897, %v1028
          %v1058 = vmul.f32 %v898, %v1028
          %v1059 = vmul.f32 %v899, %v1029
          %v1060 = vmul.f32 %v900, %v1029
          %v1061 = vmul.f32 %v901, %v1030
          %v1062 = vmul.f32 %v902, %v1030
          %v1063 = vld [vmem:[%s3] sm:$0x3]
          %v1065 = vlaneseq
          %v1066 = vshrl.u32 %v1065, 7
          %v1067 = vsub.s32 0, %v1066
          %v1068 = vrot.slane %v1063, %v1067
          %v1069 = vlaneseq
          %v1070 = vshrl.u32 %v1069, 7
          %v1071 = vsub.s32 1, %v1070
          %v1072 = vrot.slane %v1063, %v1071
          %v1075 = vmul.f32 %v1031, %v1068
          %v1076 = vmul.f32 %v1032, %v1072
          %v1077 = vmul.f32 %v1033, %v1068
          %v1078 = vmul.f32 %v1034, %v1072
          %v1079 = vmul.f32 %v1035, %v1068
          %v1080 = vmul.f32 %v1036, %v1072
          %v1081 = vmul.f32 %v1037, %v1068
          %v1082 = vmul.f32 %v1038, %v1072
          %v1083 = vmul.f32 %v1039, %v1068
          %v1084 = vmul.f32 %v1040, %v1072
          %v1085 = vmul.f32 %v1041, %v1068
          %v1086 = vmul.f32 %v1042, %v1072
          %v1087 = vmul.f32 %v1043, %v1068
          %v1088 = vmul.f32 %v1044, %v1072
          %v1089 = vmul.f32 %v1045, %v1068
          %v1090 = vmul.f32 %v1046, %v1072
          %v1091 = vmul.f32 %v1047, %v1068
          %v1092 = vmul.f32 %v1048, %v1072
          %v1093 = vmul.f32 %v1049, %v1068
          %v1094 = vmul.f32 %v1050, %v1072
          %v1095 = vmul.f32 %v1051, %v1068
          %v1096 = vmul.f32 %v1052, %v1072
          %v1097 = vmul.f32 %v1053, %v1068
          %v1098 = vmul.f32 %v1054, %v1072
          %v1099 = vmul.f32 %v1055, %v1068
          %v1100 = vmul.f32 %v1056, %v1072
          %v1101 = vmul.f32 %v1057, %v1068
          %v1102 = vmul.f32 %v1058, %v1072
          %v1103 = vmul.f32 %v1059, %v1068
          %v1104 = vmul.f32 %v1060, %v1072
          %v1105 = vmul.f32 %v1061, %v1068
          %v1106 = vmul.f32 %v1062, %v1072
          %v1107 = vld [vmem:[%s4] sm:$0x3]
          %v1109 = vlaneseq
          %v1110 = vshrl.u32 %v1109, 7
          %v1111 = vsub.s32 0, %v1110
          %v1112 = vrot.slane %v1107, %v1111
          %v1113 = vlaneseq
          %v1114 = vshrl.u32 %v1113, 7
          %v1115 = vsub.s32 1, %v1114
          %v1116 = vrot.slane %v1107, %v1115
          %v1119 = vadd.f32 %v1075, %v1112
          %v1120 = vadd.f32 %v1076, %v1116
          %v1121 = vadd.f32 %v1077, %v1112
          %v1122 = vadd.f32 %v1078, %v1116
          %v1123 = vadd.f32 %v1079, %v1112
          %v1124 = vadd.f32 %v1080, %v1116
          %v1125 = vadd.f32 %v1081, %v1112
          %v1126 = vadd.f32 %v1082, %v1116
          %v1127 = vadd.f32 %v1083, %v1112
          %v1128 = vadd.f32 %v1084, %v1116
          %v1129 = vadd.f32 %v1085, %v1112
          %v1130 = vadd.f32 %v1086, %v1116
          %v1131 = vadd.f32 %v1087, %v1112
          %v1132 = vadd.f32 %v1088, %v1116
          %v1133 = vadd.f32 %v1089, %v1112
          %v1134 = vadd.f32 %v1090, %v1116
          %v1135 = vadd.f32 %v1091, %v1112
          %v1136 = vadd.f32 %v1092, %v1116
          %v1137 = vadd.f32 %v1093, %v1112
          %v1138 = vadd.f32 %v1094, %v1116
          %v1139 = vadd.f32 %v1095, %v1112
          %v1140 = vadd.f32 %v1096, %v1116
          %v1141 = vadd.f32 %v1097, %v1112
          %v1142 = vadd.f32 %v1098, %v1116
          %v1143 = vadd.f32 %v1099, %v1112
          %v1144 = vadd.f32 %v1100, %v1116
          %v1145 = vadd.f32 %v1101, %v1112
          %v1146 = vadd.f32 %v1102, %v1116
          %v1147 = vadd.f32 %v1103, %v1112
          %v1148 = vadd.f32 %v1104, %v1116
          %v1149 = vadd.f32 %v1105, %v1112
          %v1150 = vadd.f32 %v1106, %v1116
          %1151 = vst [vmem:[%s300] sm:$0xff] %v1119
          %1152 = vst [vmem:[%s300 + $0x8] sm:$0xff] %v1120
          %1153 = vst [vmem:[%s300 + $0x10] sm:$0xff] %v1121
          %1154 = vst [vmem:[%s300 + $0x18] sm:$0xff] %v1122
          %1155 = vst [vmem:[%s300 + $0x20] sm:$0xff] %v1123
          %1156 = vst [vmem:[%s300 + $0x28] sm:$0xff] %v1124
          %1157 = vst [vmem:[%s300 + $0x30] sm:$0xff] %v1125
          %1158 = vst [vmem:[%s300 + $0x38] sm:$0xff] %v1126
          %1159 = vst [vmem:[%s300 + $0x40] sm:$0xff] %v1127
          %1160 = vst [vmem:[%s300 + $0x48] sm:$0xff] %v1128
          %1161 = vst [vmem:[%s300 + $0x50] sm:$0xff] %v1129
          %1162 = vst [vmem:[%s300 + $0x58] sm:$0xff] %v1130
          %1163 = vst [vmem:[%s300 + $0x60] sm:$0xff] %v1131
          %1164 = vst [vmem:[%s300 + $0x68] sm:$0xff] %v1132
          %1165 = vst [vmem:[%s300 + $0x70] sm:$0xff] %v1133
          %1166 = vst [vmem:[%s300 + $0x78] sm:$0xff] %v1134
          %1167 = vst [vmem:[%s300 + $0x80] sm:$0xff] %v1135
          %1168 = vst [vmem:[%s300 + $0x88] sm:$0xff] %v1136
          %1169 = vst [vmem:[%s300 + $0x90] sm:$0xff] %v1137
          %1170 = vst [vmem:[%s300 + $0x98] sm:$0xff] %v1138
          %1171 = vst [vmem:[%s300 + $0xa0] sm:$0xff] %v1139
          %1172 = vst [vmem:[%s300 + $0xa8] sm:$0xff] %v1140
          %1173 = vst [vmem:[%s300 + $0xb0] sm:$0xff] %v1141
          %1174 = vst [vmem:[%s300 + $0xb8] sm:$0xff] %v1142
          %1175 = vst [vmem:[%s300 + $0xc0] sm:$0xff] %v1143
          %1176 = vst [vmem:[%s300 + $0xc8] sm:$0xff] %v1144
          %1177 = vst [vmem:[%s300 + $0xd0] sm:$0xff] %v1145
          %1178 = vst [vmem:[%s300 + $0xd8] sm:$0xff] %v1146
          %1179 = vst [vmem:[%s300 + $0xe0] sm:$0xff] %v1147
          %1180 = vst [vmem:[%s300 + $0xe8] sm:$0xff] %v1148
          %1181 = vst [vmem:[%s300 + $0xf0] sm:$0xff] %v1149
          %1182 = vst [vmem:[%s300 + $0xf8] sm:$0xff] %v1150
        $region56: #{tpu_custom_call.1} parent=39 // pred_fallthru
          _
        %s1183 = sand.u32 %s162, 1
        %s1184 = scalar_lea.sflag [#allocation5], %s1183
        %s1185 = sand.u32 %s162, 1
        %s1186 = smul.addr %s1185, 256
        %s1187 = scalar_lea.vmem [#allocation8], %s1186
        // Predicated region
        $region57: #{tpu_custom_call.1} parent=39 // pred_check
          %p1188 = pneg %p172
        $region58: #{tpu_custom_call.1} parent=39 // pred_check_branch
          %1190 = sbr.rel (%p1188) target = $region60
        $region59: #{tpu_custom_call.1} parent=39 // pred_region
          %s1191 = smul.u32 16, %s29
          %s1193 = ssub.s32 4096, 4096
          %1194 = vsyncadd %s1184, %s1193
          %s1195 = smul.addr %s1191, 2
          %s1196 = smul.addr %s1195, 128
          %s1197 = scalar_lea.hbm %s5, %s1196
          %s1198 = sshll.u32 %s1187, 4
          %s1199 = int_to_ptr.vmem [resolvable:$true] %s1198
          %1204 = dma.vmem_to_hbm [thread:$0]  %s1199, 4096, %s1197, %s1184, 256, 256, 16
        $region60: #{tpu_custom_call.1} parent=39 // pred_fallthru
          _
      $region40: #{tpu_custom_call.1} parent=5 // pred_fallthru
        _
      %p1205 = scmp.le.s32.totalorder 2, %s20
      // Predicated region
      $region61: #{tpu_custom_call.1} parent=5 // pred_check
        %p1206 = pneg %p1205
      $region62: #{tpu_custom_call.1} parent=5 // pred_check_branch
        %1208 = sbr.rel (%p1206) target = $region64
      $region63: #{tpu_custom_call.1} parent=5 // pred_region
        %s1209 = ssub.s32 %s20, 2
        // Predicated region
        $region65: #{tpu_custom_call.1} parent=63 // pred_check
          %p1210 = pneg %p178
        $region66: #{tpu_custom_call.1} parent=63 // pred_check_branch
          %1212 = sbr.rel (%p1210) target = $region68
        $region67: #{tpu_custom_call.1} parent=63 // pred_region
          %s1213 = sand.u32 %s163, 1
          %s1214 = scalar_lea.sflag [#allocation5], %s1213
          %s1215 = sand.u32 %s163, 1
          %s1216 = smul.addr %s1215, 256
          %s1217 = scalar_lea.vmem [#allocation8], %s1216
          %1218 = dma.done %s1214, 4096
        $region68: #{tpu_custom_call.1} parent=63 // pred_fallthru
          _
      $region64: #{tpu_custom_call.1} parent=5 // pred_fallthru
        _
    $region6: #{tpu_custom_call.1} parent=1 // loop_footer
      %s24 = sadd.s32 1, %s20
    $region7: #{tpu_custom_call.1} parent=1 // loop_footer_branch
      %19 = sbr.rel target = $region3
    $region8: #{tpu_custom_call.1} parent=1 // loop_exit
      _
    %1219 = vsyncpa [#allocation4], 1
    %s1220 = scalar_lea.sflag [#allocation4], 1
    %1221 = vsyncpa %s1220, 1
    %1222 = vsyncpa [#allocation7], 1
    %s1223 = scalar_lea.sflag [#allocation7], 1
    %1224 = vsyncpa %s1223, 1
    %1225 = vsyncpa [#allocation5], 1
    %s1226 = scalar_lea.sflag [#allocation5], 1
    %1227 = vsyncpa %s1226, 1

</llo_original>
